<compile_context>
chip_gen: v7x
topology: tpu7x:2x2x1
jax: 0.10.0
libtpu: 0.0.40
codegen_flags: <defaults>
</compile_context>

<pallas_src>
import functools

import jax
import jax.numpy as jnp
from jax.experimental import pallas as pl
from jax.experimental.pallas import tpu as pltpu


def _policy_head_kernel(x_ref, w_ref, out_ref, kaug_ref):
    """One grid step processes Bt board positions.

    x_ref    : (Bt, S, H)          bf16  activations
    w_ref    : (H, 2*Dp + Npad)    bf16  merged [Wq*scale/nh | Wk | promo] weight,
                                         each segment 128-lane aligned
    out_ref  : (Bt, S, Npad)       f32   policy logits, lanes [0,S)=scores,
                                         [S,S+3)=promo, rest discarded
    kaug_ref : (Bt, Npad, Dp)      bf16  scratch: k rows + 3 zero promo rows
    """
    Bt, S, H = x_ref.shape
    n_pad = out_ref.shape[2]
    d_pad = (w_ref.shape[1] - n_pad) // 2

    # Flatten batch into rows so the projection feeds the MXU with Bt*S rows.
    xf = x_ref[...].reshape(Bt * S, H)

    # Single wide projection: q | k | promo in one MXU pass (bf16 in, f32 acc).
    qkp = jnp.dot(xf, w_ref[...], preferred_element_type=jnp.float32)

    # 128-aligned static lane slices (free); q/k go bf16 for the scores matmul.
    q = qkp[:, :d_pad].astype(jnp.bfloat16).reshape(Bt, S, d_pad)
    k = qkp[:, d_pad:2 * d_pad].astype(jnp.bfloat16).reshape(Bt, S, d_pad)
    promo = qkp[:, 2 * d_pad:].reshape(Bt, S, n_pad)            # f32, promo at [S,S+3)

    # k rows land in kaug rows [0,S); rows [S,S+3) must be zero so the scores
    # matmul contributes nothing to the promo lanes.  Rows [S+3, Npad) feed
    # output lanes that are sliced away in the wrapper, so they may stay stale.
    kaug_ref[:, :S, :] = k
    kaug_ref[:, S:S + 3, :] = jnp.zeros((Bt, 3, d_pad), jnp.bfloat16)

    # mean_h(q_h @ k_h^T) * scale == q @ k^T with scale/nh folded into Wq.
    # bf16 operands, f32 accumulation; batched dot_general contracts last dims
    # (no materialized transpose).  Result directly fills all Npad output lanes.
    scores = jnp.einsum("bqd,bkd->bqk", q, kaug_ref[...],
                        preferred_element_type=jnp.float32)      # (Bt, S, Npad)

    out_ref[...] = scores + promo


def _vmem_capacity_bytes() -> int:
    try:
        return int(pltpu.get_tpu_info().vmem_capacity_bytes)
    except Exception:  # pragma: no cover - conservative fallback
        return 128 * 1024 * 1024


def _pick_batch_block(batch: int, seq: int, hidden: int, d_pad: int,
                      n_pad: int, vmem_budget: int,
                      rows_target: int = 2048) -> int:
    """Pick Bt so each grid step feeds the MXU with ~rows_target rows while
    fitting the per-generation VMEM budget; keep >= 2 grid steps when possible
    so both v7x TensorCores get work."""
    per_b = (2 * seq * hidden * 2            # x tile bf16, double-buffered
             + 2 * seq * n_pad * 4           # out tile f32, double-buffered
             + n_pad * d_pad * 2             # kaug scratch bf16
             + seq * (2 * d_pad + n_pad) * 4  # qkp f32 intermediate
             + seq * 2 * d_pad * 2           # bf16 q/k copies
             + seq * n_pad * 4)              # scores f32
    bt_vmem = max(1, vmem_budget // max(per_b, 1))
    bt = max(1, min(batch, rows_target // max(seq, 1), bt_vmem))
    if batch >= 2:
        bt = min(bt, max(1, batch // 2))     # keep grid >= 2 for megacore
    while batch % bt:                        # must evenly divide the batch
        bt -= 1
    return bt


def chess_policy_head(x, wq, wk, wp, *, num_heads: int, head_dim: int,
                      batch_block: int | None = None):
    """x: (B, S, H).  wq, wk: (nh*hd, H) PyTorch layout.  wp: (4, hd)."""
    B, S, H = x.shape
    D = num_heads * head_dim
    scale = head_dim ** (-0.5)

    # Lane padding: output gets Npad (>= S+3) lanes, q/k get Dpad (>= D) lanes
    # so every merged-weight segment starts at a 128-aligned lane offset.
    n_pad = ((S + 3 + 127) // 128) * 128
    d_pad = ((D + 127) // 128) * 128
    w_cols = 2 * d_pad + n_pad

    # ---- per-generation VMEM budget ----------------------------------------
    vmem_cap = _vmem_capacity_bytes()
    vmem_limit = min(int(vmem_cap * 0.85), 112 * 1024 * 1024)
    w_vmem = H * w_cols * 2 * 2              # bf16 weight, double-buffered
    budget = max(1, int(vmem_limit * 0.8) - w_vmem)

    Bt = batch_block if batch_block is not None else _pick_batch_block(
        B, S, H, d_pad, n_pad, budget)
    assert B % Bt == 0

    # ---- trace-time weight folding (all exact) -----------------------------
    f32 = jnp.float32
    wq_t = wq.T.astype(f32) * (scale / num_heads)                 # (H, D)
    wk_t = wk.T.astype(f32)                                       # (H, D)
    # promo path: pk = x @ mean_h(Wk_h^T); p4 = pk @ Wp^T;
    # promo_j = (p4_{j+1} + p4_0) * scale  ==>  promo = x @ (Wk_mean Wp^T A)
    wk_mean = wk_t.reshape(H, num_heads, head_dim).mean(axis=1)   # (H, hd)
    fold = scale * jnp.array([[1.0, 1.0, 1.0],
                              [1.0, 0.0, 0.0],
                              [0.0, 1.0, 0.0],
                              [0.0, 0.0, 1.0]], dtype=f32)        # (4, 3)
    w_promo = wk_mean @ wp.T.astype(f32) @ fold                   # (H, 3)

    # Merged weight: [ Wq*scale/nh | pad | Wk | pad | 0..0 promo 0..0 ].
    w_all = jnp.zeros((H, w_cols), f32)
    w_all = w_all.at[:, :D].set(wq_t)
    w_all = w_all.at[:, d_pad:d_pad + D].set(wk_t)
    w_all = w_all.at[:, 2 * d_pad + S:2 * d_pad + S + 3].set(w_promo)
    w_all = w_all.astype(jnp.bfloat16)

    # NOTE: on v7x, if VMEM gets tight with very large Bt, the (grid-invariant)
    # weight BlockSpec can additionally use pipeline_mode=pl.Buffered(1).
    out_padded = pl.pallas_call(
        _policy_head_kernel,
        out_shape=jax.ShapeDtypeStruct((B, S, n_pad), jnp.float32),
        grid_spec=pltpu.PrefetchScalarGridSpec(
            num_scalar_prefetch=0,
            grid=(B // Bt,),
            in_specs=[
                pl.BlockSpec((Bt, S, H), lambda b: (b, 0, 0)),
                pl.BlockSpec((H, w_cols), lambda b: (0, 0)),
            ],
            out_specs=pl.BlockSpec((Bt, S, n_pad), lambda b: (b, 0, 0)),
            scratch_shapes=[pltpu.VMEM((Bt, n_pad, d_pad), jnp.bfloat16)],
        ),
        compiler_params=pltpu.CompilerParams(
            dimension_semantics=("parallel",),
            vmem_limit_bytes=int(vmem_limit)),
    )(x.astype(jnp.bfloat16), w_all)

    # Restore the module's exact (B, S, S+3) layout.
    return out_padded[:, :, :S + 3]


def _reference(x, wq, wk, wp, *, num_heads: int, head_dim: int):
    """Pure-JAX f32 mirror of the PyTorch forward, for a correctness check."""
    B, S, H = x.shape
    scale = head_dim ** (-0.5)
    q = (x @ wq.T).reshape(B, S, num_heads, head_dim).transpose(0, 2, 1, 3)
    k = (x @ wk.T).reshape(B, S, num_heads, head_dim).transpose(0, 2, 1, 3)
    scores = jnp.einsum("bhqd,bhkd->bhqk", q, k) * scale
    scores = scores.mean(axis=1)
    pk = k.mean(axis=1)                       # (B, S, hd)
    p4 = pk @ wp.T                            # (B, S, 4)
    q_promo = p4[:, :, 0:1]
    promo = (p4[:, :, 1:4] + q_promo) * scale
    return jnp.concatenate([scores, promo], axis=-1)


if __name__ == "__main__":
    # Small shapes consistent with the module's forward.
    B, S = 2, 8
    hidden_size, num_heads, head_dim = 32, 4, 8
    D = num_heads * head_dim

    key = jax.random.PRNGKey(0)
    kx, kq, kk, kp = jax.random.split(key, 4)

    x = jax.random.normal(kx, (B, S, hidden_size), dtype=jnp.float32)

    # Deterministic xavier-normal-style init (std = sqrt(2/(fan_in+fan_out))).
    def xavier(k, out_f, in_f):
        std = (2.0 / (in_f + out_f)) ** 0.5
        return std * jax.random.normal(k, (out_f, in_f), dtype=jnp.float32)

    wq = xavier(kq, D, hidden_size)           # query.weight      (out, in)
    wk = xavier(kk, D, hidden_size)           # key.weight        (out, in)
    wp = xavier(kp, 4, head_dim)              # promo_head.weight (4, head_dim)

    run = functools.partial(chess_policy_head, num_heads=num_heads,
                            head_dim=head_dim)
    out = run(x, wq, wk, wp)
    out = jax.block_until_ready(out)

    ref = _reference(x, wq, wk, wp, num_heads=num_heads, head_dim=head_dim)
    assert out.shape == (B, S, S + 3), out.shape
    # bf16 activations/weights with f32 accumulation -> loosened tolerance.
    assert jnp.allclose(out, ref, atol=5e-2, rtol=5e-2), "mismatch vs reference"

    print("KERNEL_OK")
</pallas_src>

<mosaic_0001>
module attributes {stable_mosaic.version = 11 : i64} {
  func.func @_policy_head_kernel(%arg0: i32, %arg1: memref<1x8x32xbf16, #tpu.memory_space<vmem>>, %arg2: memref<32x384xbf16, #tpu.memory_space<vmem>>, %arg3: memref<1x8x128xf32, #tpu.memory_space<vmem>>, %arg4: memref<1x128x128xbf16, #tpu.memory_space<vmem>>) attributes {dimension_semantics = [#tpu.dimension_semantics<parallel>], iteration_bounds = array<i64: 2>, scalar_prefetch = 0 : i64, scratch_operands = 1 : i64, tpu.core_type = #tpu.core_type<tc>, window_params = [{transform_indices = @transform_0, window_bounds = array<i64: 1, 8, 32>}, {pipeline_mode = #tpu.pipeline_mode<synchronous>, transform_indices = @transform_1, window_bounds = array<i64: 32, 384>}, {transform_indices = @transform_2, window_bounds = array<i64: 1, 8, 128>}]} {
    %c0 = arith.constant 0 : index
    %c0_0 = arith.constant 0 : index
    %c0_1 = arith.constant 0 : index
    %0 = vector.load %arg1[%c0, %c0_0, %c0_1] : memref<1x8x32xbf16, #tpu.memory_space<vmem>>, vector<1x8x32xbf16>
    %1 = vector.shape_cast %0 : vector<1x8x32xbf16> to vector<8x32xbf16>
    %c0_2 = arith.constant 0 : index
    %c0_3 = arith.constant 0 : index
    %2 = vector.load %arg2[%c0_2, %c0_3] : memref<32x384xbf16, #tpu.memory_space<vmem>>, vector<32x384xbf16>
    %cst = arith.constant dense<0.000000e+00> : vector<8x384xf32>
    %3 = tpu.matmul %1, %2, %cst {dimension_numbers = #tpu.dot_dimension_numbers<[1], [0], [0], [1], [0, 0, 1, 1], [], []>} : vector<8x32xbf16>, vector<32x384xbf16>, vector<8x384xf32> -> vector<8x384xf32>
    %4 = vector.extract_strided_slice %3 {offsets = [0, 0], sizes = [8, 128], strides = [1, 1]} : vector<8x384xf32> to vector<8x128xf32>
    %5 = arith.truncf %4 : vector<8x128xf32> to vector<8x128xbf16>
    %6 = vector.shape_cast %5 : vector<8x128xbf16> to vector<1x8x128xbf16>
    %7 = vector.extract_strided_slice %3 {offsets = [0, 128], sizes = [8, 128], strides = [1, 1]} : vector<8x384xf32> to vector<8x128xf32>
    %8 = arith.truncf %7 : vector<8x128xf32> to vector<8x128xbf16>
    %9 = vector.shape_cast %8 : vector<8x128xbf16> to vector<1x8x128xbf16>
    %10 = vector.extract_strided_slice %3 {offsets = [0, 256], sizes = [8, 128], strides = [1, 1]} : vector<8x384xf32> to vector<8x128xf32>
    %11 = vector.shape_cast %10 : vector<8x128xf32> to vector<1x8x128xf32>
    %c0_4 = arith.constant 0 : index
    %c0_5 = arith.constant 0 : index
    %c0_6 = arith.constant 0 : index
    %12 = vector.load %arg4[%c0_4, %c0_5, %c0_6] : memref<1x128x128xbf16, #tpu.memory_space<vmem>>, vector<1x8x128xbf16>
    tpu.vector_store %arg4[%c0_4, %c0_5, %c0_6], %9 {strides = array<i32>} : memref<1x128x128xbf16, #tpu.memory_space<vmem>>, vector<1x8x128xbf16>,
    %cst_7 = arith.constant 0.000000e+00 : bf16
    %13 = vector.broadcast %cst_7 : bf16 to vector<1x3x128xbf16>
    %c0_8 = arith.constant 0 : index
    %c8 = arith.constant 8 : index
    %c0_9 = arith.constant 0 : index
    %14 = vector.load %arg4[%c0_8, %c8, %c0_9] : memref<1x128x128xbf16, #tpu.memory_space<vmem>>, vector<1x3x128xbf16>
    tpu.vector_store %arg4[%c0_8, %c8, %c0_9], %13 {strides = array<i32>} : memref<1x128x128xbf16, #tpu.memory_space<vmem>>, vector<1x3x128xbf16>,
    %c0_10 = arith.constant 0 : index
    %c0_11 = arith.constant 0 : index
    %c0_12 = arith.constant 0 : index
    %15 = vector.load %arg4[%c0_10, %c0_11, %c0_12] : memref<1x128x128xbf16, #tpu.memory_space<vmem>>, vector<1x128x128xbf16>
    "tpu.trace_start"() <{level = 10 : i32, message = "bqd,bkd->bqk"}> : () -> ()
    %cst_13 = arith.constant dense<0.000000e+00> : vector<1x8x128xf32>
    %16 = tpu.matmul %6, %15, %cst_13 {dimension_numbers = #tpu.dot_dimension_numbers<[2], [2], [1], [1], [0, 0, 0, 1, 1, 1], [0], [0]>} : vector<1x8x128xbf16>, vector<1x128x128xbf16>, vector<1x8x128xf32> -> vector<1x8x128xf32>
    "tpu.trace_stop"() : () -> ()
    %17 = arith.addf %16, %11 : vector<1x8x128xf32>
    %c0_14 = arith.constant 0 : index
    %c0_15 = arith.constant 0 : index
    %c0_16 = arith.constant 0 : index
    %18 = vector.load %arg3[%c0_14, %c0_15, %c0_16] : memref<1x8x128xf32, #tpu.memory_space<vmem>>, vector<1x8x128xf32>
    tpu.vector_store %arg3[%c0_14, %c0_15, %c0_16], %17 {strides = array<i32>} : memref<1x8x128xf32, #tpu.memory_space<vmem>>, vector<1x8x128xf32>,
    return
  }
  func.func @transform_0(%arg0: i32) -> (i32, i32, i32) {
    %c0_i32 = arith.constant 0 : i32
    %c0_i32_0 = arith.constant 0 : i32
    %c0_i32_1 = arith.constant 0 : i32
    return %arg0, %c0_i32, %c0_i32_0 : i32, i32, i32
  }
  func.func @transform_1(%arg0: i32) -> (i32, i32) {
    %c0_i32 = arith.constant 0 : i32
    %c0_i32_0 = arith.constant 0 : i32
    %c0_i32_1 = arith.constant 0 : i32
    return %c0_i32, %c0_i32_0 : i32, i32
  }
  func.func @transform_2(%arg0: i32) -> (i32, i32, i32) {
    %c0_i32 = arith.constant 0 : i32
    %c0_i32_0 = arith.constant 0 : i32
    %c0_i32_1 = arith.constant 0 : i32
    return %arg0, %c0_i32, %c0_i32_0 : i32, i32, i32
  }
}

</mosaic_0001>

<llo_original>
// kernel: tpu_custom_call.1
$region0: #{tpu_custom_call.1}
  #allocation0 [shape = 'u32[]', space=smem, size = 0x4, offset = 0x4, fixed_abs, tag = 'smem constant byte address 0x4 - core index']
  #allocation1 [shape = 'u32[144,128]{1,0:T(1,128)}', space=vmem, size = 0x12000, scoped, tag = 'internal scratch']
  #allocation2 [shape = 'bf16[1,128,128]{2,1,0:T(16,128)(2,1)}', space=vmem, size = 0x8000, scoped, tag = 'scratch operand']
  %s0 = inlined_call_operand.hbm [shape: bf16[2,8,32], index: 0, kind: input, shape index: {}]
  %s1 = inlined_call_operand.hbm [shape: bf16[32,384], index: 1, kind: input, shape index: {}]
  %s2 = inlined_call_operand.hbm [shape: f32[2,8,128], index: 2, kind: output, shape index: {}]
  %s3 = sld [smem:[#allocation0]]
  $region49: #{tpu_custom_call.1} parent=0
    _
  %s5 = ssub.s32 1, %s3
  %s6 = scalar_select 0, %s5, %s3
  $region1: #{tpu_custom_call.1} parent=0
    #allocation3 [shape = 'u8[4096]{0}', space=vmem, size = 0x1000, scoped, tag = 'input window, operand 0']
    #allocation4 [shape = 's32[2]{0}', space=sflag, size = 0x8, scoped, tag = 'scoped memory for tpu_custom_call.1']
    #allocation5 [shape = 's32[2]{0}', space=sflag, size = 0x8, scoped, tag = 'scoped memory for tpu_custom_call.1']
    #allocation6 [shape = 'u8[24576]{0}', space=vmem, size = 0x6000, scoped, tag = 'input window, operand 1, single buffered']
    #allocation7 [shape = 's32[1]{0}', space=sflag, size = 0x4, scoped, tag = 'scoped memory for tpu_custom_call.1']
    #allocation8 [shape = 'u8[8192]{0}', space=vmem, size = 0x2000, scoped, tag = 'output window, operand 0']
    %7 = vsyncpa [#allocation4], 0
    %s8 = scalar_lea.sflag [#allocation4], 1
    %9 = vsyncpa %s8, 0
    %10 = vsyncpa [#allocation7], 0
    %11 = vsyncpa [#allocation5], 0
    %s12 = scalar_lea.sflag [#allocation5], 1
    %13 = vsyncpa %s12, 0
    loop: start=0, step=1, limit=4
    $region2: #{tpu_custom_call.1} parent=1 // loop_pre_header
      _
    $region3: #{tpu_custom_call.1} parent=1 // loop_header
      %s15 = sphi 0, %s19
      %p16 = scmp.ge.s32.totalorder %s15, 4
      %s25 = sphi 0, %s27
      %s28 = sphi 0, %s25
      %s29 = sphi 0, %s28
      %s45 = sphi 0, %s29
      %s49 = sphi 0, %s49
      %s51 = sphi 0, %s49
      %s52 = sphi 0, %s51
      %s66 = sphi 0, %s52
      %s72 = sphi 0, %s74
      %s75 = sphi 0, %s72
      %s76 = sphi 0, %s75
      %s92 = sphi 0, %s76
    $region4: #{tpu_custom_call.1} parent=1 // loop_header_branch
      %18 = sbr.rel (%p16) target = $region8
    $region5: #{tpu_custom_call.1} parent=1 // loop_body
      %s20 = ssub.s32 %s15, 1
      %s21 = ssub.s32 %s15, 2
      %s22 = sadd.s32 %s15, 1
      %s23 = ssub.s32 %s15, %s22
      %p24 = scmp.eq.s32.totalorder %s23, 0
      %s26 = sadd.s32 %s25, 1
      %s27 = scalar_select %p24, %s25, %s26
      %p30 = pneg %p24
      %p31 = scmp.eq.s32.totalorder %s15, 1
      %p32 = por %p30, %p31
      %p33 = scmp.ne.s32.totalorder %s25, %s28
      %p34 = scmp.eq.s32.totalorder %s15, 0
      %p35 = por %p33, %p34
      %p36 = scmp.ne.s32.totalorder %s25, %s28
      %p37 = scmp.eq.s32.totalorder %s20, 1
      %p38 = por %p36, %p37
      %p39 = scmp.ne.s32.totalorder %s28, %s29
      %p40 = scmp.eq.s32.totalorder %s20, 0
      %p41 = por %p39, %p40
      %p42 = scmp.ne.s32.totalorder %s28, %s29
      %p43 = scmp.eq.s32.totalorder %s21, 1
      %p44 = por %p42, %p43
      %p46 = scmp.ne.s32.totalorder %s29, %s45
      %p47 = scmp.eq.s32.totalorder %s21, 0
      %p48 = por %p46, %p47
      %s50 = sadd.s32 %s49, 1
      %p53 = scmp.eq.s32.totalorder %s15, 1
      %p54 = scmp.ne.s32.totalorder %s49, %s51
      %p55 = scmp.eq.s32.totalorder %s15, 0
      %p56 = por %p54, %p55
      %p57 = scmp.ne.s32.totalorder %s49, %s51
      %p58 = scmp.eq.s32.totalorder %s20, 1
      %p59 = por %p57, %p58
      %p60 = scmp.ne.s32.totalorder %s51, %s52
      %p61 = scmp.eq.s32.totalorder %s20, 0
      %p62 = por %p60, %p61
      %p63 = scmp.ne.s32.totalorder %s51, %s52
      %p64 = scmp.eq.s32.totalorder %s21, 1
      %p65 = por %p63, %p64
      %p67 = scmp.ne.s32.totalorder %s52, %s66
      %p68 = scmp.eq.s32.totalorder %s21, 0
      %p69 = por %p67, %p68
      %s70 = ssub.s32 %s15, %s22
      %p71 = scmp.eq.s32.totalorder %s70, 0
      %s73 = sadd.s32 %s72, 1
      %s74 = scalar_select %p71, %s72, %s73
      %p77 = pneg %p71
      %p78 = scmp.eq.s32.totalorder %s15, 1
      %p79 = por %p77, %p78
      %p80 = scmp.ne.s32.totalorder %s72, %s75
      %p81 = scmp.eq.s32.totalorder %s15, 0
      %p82 = por %p80, %p81
      %p83 = scmp.ne.s32.totalorder %s72, %s75
      %p84 = scmp.eq.s32.totalorder %s20, 1
      %p85 = por %p83, %p84
      %p86 = scmp.ne.s32.totalorder %s75, %s76
      %p87 = scmp.eq.s32.totalorder %s20, 0
      %p88 = por %p86, %p87
      %p89 = scmp.ne.s32.totalorder %s75, %s76
      %p90 = scmp.eq.s32.totalorder %s21, 1
      %p91 = por %p89, %p90
      %p93 = scmp.ne.s32.totalorder %s76, %s92
      %p94 = scmp.eq.s32.totalorder %s21, 0
      %p95 = por %p93, %p94
      %p96 = scmp.le.s32.totalorder 1, %s15
      %p97 = scmp.lt.s32.totalorder %s15, 3
      %p98 = pnand %p96, %p97
      %p99 = pneg %p98
      // Predicated region
      $region9: #{tpu_custom_call.1} parent=5 // pred_check
        _
      $region10: #{tpu_custom_call.1} parent=5 // pred_check_branch
        %101 = sbr.rel (%p98) target = $region12
      $region11: #{tpu_custom_call.1} parent=5 // pred_region
        %s102 = ssub.s32 %s15, 1
        // Predicated region
        $region13: #{tpu_custom_call.1} parent=11 // pred_check
          %p103 = pneg %p62
        $region14: #{tpu_custom_call.1} parent=11 // pred_check_branch
          %105 = sbr.rel (%p103) target = $region16
        $region15: #{tpu_custom_call.1} parent=11 // pred_region
          %s107 = ssub.s32 768, 768
          %108 = vsyncadd [#allocation7], %s107
          %s109 = sshll.u32 [#allocation6], 4
          %s110 = int_to_ptr.vmem [resolvable:$true] %s109
          %115 = dma.hbm_to_vmem [thread:$0]  %s1, 768, %s110, [#allocation7], 192, 192, 12
        $region16: #{tpu_custom_call.1} parent=11 // pred_fallthru
          _
      $region12: #{tpu_custom_call.1} parent=5 // pred_fallthru
        _
      %p116 = scmp.lt.s32.totalorder %s15, 2
      // Predicated region
      $region17: #{tpu_custom_call.1} parent=5 // pred_check
        %p117 = pneg %p116
      $region18: #{tpu_custom_call.1} parent=5 // pred_check_branch
        %119 = sbr.rel (%p117) target = $region20
      $region19: #{tpu_custom_call.1} parent=5 // pred_region
        // Predicated region
        $region21: #{tpu_custom_call.1} parent=19 // pred_check
          %p120 = pneg %p35
        $region22: #{tpu_custom_call.1} parent=19 // pred_check_branch
          %122 = sbr.rel (%p120) target = $region24
        $region23: #{tpu_custom_call.1} parent=19 // pred_region
          %s123 = sand.u32 %s25, 1
          %s124 = scalar_lea.sflag [#allocation4], %s123
          %s125 = sand.u32 %s25, 1
          %s126 = smul.addr %s125, 4
          %s127 = scalar_lea.vmem [#allocation3], %s126
          %s129 = ssub.s32 64, 64
          %130 = vsyncadd %s124, %s129
          %s131 = smul.addr %s15, 64
          %s132 = scalar_lea.hbm %s0, %s131
          %s134 = sshll.u32 %s127, 4
          %s135 = int_to_ptr.vmem [resolvable:$true] %s134
          %137 = dma.hbm_to_vmem [thread:$0]  %s132, 64, %s135, %s124
        $region24: #{tpu_custom_call.1} parent=19 // pred_fallthru
          _
      $region20: #{tpu_custom_call.1} parent=5 // pred_fallthru
        _
      %p138 = scmp.le.s32.totalorder 1, %s15
      %p139 = scmp.lt.s32.totalorder %s15, 3
      %p140 = pnand %p138, %p139
      %p141 = pneg %p140
      // Predicated region
      $region25: #{tpu_custom_call.1} parent=5 // pred_check
        _
      $region26: #{tpu_custom_call.1} parent=5 // pred_check_branch
        %143 = sbr.rel (%p140) target = $region28
      $region27: #{tpu_custom_call.1} parent=5 // pred_region
        %s144 = ssub.s32 %s15, 1
        %s145 = sand.u32 %s28, 1
        %s146 = scalar_lea.sflag [#allocation4], %s145
        %s147 = sand.u32 %s28, 1
        %s148 = smul.addr %s147, 4
        %s149 = scalar_lea.vmem [#allocation3], %s148
        // Predicated region
        $region29: #{tpu_custom_call.1} parent=27 // pred_check
          %p150 = pneg %p41
        $region30: #{tpu_custom_call.1} parent=27 // pred_check_branch
          %152 = sbr.rel (%p150) target = $region32
        $region31: #{tpu_custom_call.1} parent=27 // pred_region
          %153 = dma.done %s146, 64
        $region32: #{tpu_custom_call.1} parent=27 // pred_fallthru
          _
        // Predicated region
        $region33: #{tpu_custom_call.1} parent=27 // pred_check
          %p154 = pneg %p62
        $region34: #{tpu_custom_call.1} parent=27 // pred_check_branch
          %156 = sbr.rel (%p154) target = $region36
        $region35: #{tpu_custom_call.1} parent=27 // pred_region
          %157 = dma.done [#allocation7], 768
        $region36: #{tpu_custom_call.1} parent=27 // pred_fallthru
          _
        %s158 = sand.u32 %s28, 1
        %s159 = scalar_lea.sflag [#allocation4], %s158
        %s160 = sand.u32 %s28, 1
        %s161 = smul.addr %s160, 4
        %s162 = scalar_lea.vmem [#allocation3], %s161
        %p163 = pneg %p41
        %p164 = pneg %p38
        %p165 = pneg %p62
        %p166 = pneg %p59
        %p167 = pneg %p88
        %p168 = pneg %p85
        %s169 = sand.u32 %s75, 1
        %s170 = scalar_lea.sflag [#allocation5], %s169
        %s171 = sand.u32 %s75, 1
        %s172 = smul.addr %s171, 8
        %s173 = scalar_lea.vmem [#allocation8], %s172
        %v175 = vld [vmem:[%s149] sm:$0xf]
        %v176 = vld [vmem:[#allocation6] sm:$0xff]
        %v177 = vld [vmem:[#allocation6 + $0x8] sm:$0xf]
        %v178 = vld [vmem:[#allocation6 + $0xc] sm:$0xff]
        %v179 = vld [vmem:[#allocation6 + $0x14] sm:$0xf]
        %v180 = vld [vmem:[#allocation6 + $0x18] sm:$0xff]
        %v181 = vld [vmem:[#allocation6 + $0x20] sm:$0xf]
        %v182 = vld [vmem:[#allocation6 + $0x24] sm:$0xff]
        %v183 = vld [vmem:[#allocation6 + $0x2c] sm:$0xf]
        %v192 = vunpack.c.l.b16 %v176
        %v193 = vunpack.c.h.b16 %v176
        %v194 = vunpack.c.l.b16 %v177
        %v195 = vunpack.c.l.b16 %v178
        %v196 = vunpack.c.h.b16 %v178
        %v197 = vunpack.c.l.b16 %v179
        %v198 = vunpack.c.l.b16 %v180
        %v199 = vunpack.c.h.b16 %v180
        %v200 = vunpack.c.l.b16 %v181
        %v201 = vunpack.c.l.b16 %v182
        %v202 = vunpack.c.h.b16 %v182
        %v203 = vunpack.c.l.b16 %v183
        %v204 = vpack.c.b16 %v195, %v192
        %v205 = vpack.c.b16 %v196, %v193
        %v206 = vpack.c.b16 %v197, %v194
        %v207 = vpack.c.b16 %v201, %v198
        %v208 = vpack.c.b16 %v202, %v199
        %v209 = vpack.c.b16 %v203, %v200
        %vm216 = vcmask 261120
        %v218 = vsel %vm216, %v175, 0
        %220 = vmatprep.subr.bf16.mxu0 %v205
        %221 = vmatpush1.bf16.msra.mxu0 %v204
        %222 = vmatprep.subr.bf16.mxu0 %v208
        %223 = vmatpush1.bf16.msra.mxu0 %v207
        %224 = vmatprep.subr.bf16.mxu0 0
        %225 = vmatpush1.bf16.msra.mxu0 0
        %226 = vmatprep.subr.bf16.mxu0 0
        %227 = vmatpush1.bf16.msra.mxu0 0
        %228 = vmatprep.subr.bf16.mxu0 0
        %229 = vmatpush1.bf16.msra.mxu0 0
        %230 = vmatprep.subr.bf16.mxu0 0
        %231 = vmatpush1.bf16.msra.mxu0 0
        %232 = vmatprep.subr.bf16.mxu0 0
        %233 = vmatpush1.bf16.msra.mxu0 0
        %234 = vmatprep.subr.bf16.mxu0 0
        %235 = vmatpush1.bf16.msra.mxu0 0
        %236 = vmatprep.subr.bf16.mxu0 0
        %237 = vmatpush1.bf16.msra.mxu0 0
        %238 = vmatprep.subr.bf16.mxu0 0
        %239 = vmatpush1.bf16.msra.mxu0 0
        %240 = vmatprep.subr.bf16.mxu0 0
        %241 = vmatpush1.bf16.msra.mxu0 0
        %242 = vmatprep.subr.bf16.mxu0 0
        %243 = vmatpush1.bf16.msra.mxu0 0
        %244 = vmatprep.subr.bf16.mxu0 0
        %245 = vmatpush1.bf16.msra.mxu0 0
        %246 = vmatprep.subr.bf16.mxu0 0
        %247 = vmatpush1.bf16.msra.mxu0 0
        %248 = vmatprep.subr.bf16.mxu0 0
        %249 = vmatpush1.bf16.msra.mxu0 0
        %250 = vmatprep.subr.bf16.mxu0 0
        %251 = vmatpush1.bf16.msra.mxu0 0
        %252 = vmatprep.mubr.bf16.mxu0 0
        %253 = vmatmul.mubr.bf16.gmra.mrb[0].mxu0 %v218
        %v254 = vpop.f32.mrb[0].mxu0
        %v255 = vadd.f32 0.0, %v254
        %v256 = vpop.f32.mrb[0].mxu0
        %v257 = vadd.f32 0.0, %v256
        %v258 = vpop.f32.mrb[0].mxu0
        %v259 = vpop.f32.mrb[0].mxu0
        %260 = vdwg.mxu0
        %261 = vmatprep.subr.bf16.mxu0 0
        %262 = vmatpush1.bf16.msra.mxu0 %v206
        %263 = vmatprep.subr.bf16.mxu0 0
        %264 = vmatpush1.bf16.msra.mxu0 %v209
        %265 = vmatprep.subr.bf16.mxu0 0
        %266 = vmatpush1.bf16.msra.mxu0 0
        %267 = vmatprep.subr.bf16.mxu0 0
        %268 = vmatpush1.bf16.msra.mxu0 0
        %269 = vmatprep.subr.bf16.mxu0 0
        %270 = vmatpush1.bf16.msra.mxu0 0
        %271 = vmatprep.subr.bf16.mxu0 0
        %272 = vmatpush1.bf16.msra.mxu0 0
        %273 = vmatprep.subr.bf16.mxu0 0
        %274 = vmatpush1.bf16.msra.mxu0 0
        %275 = vmatprep.subr.bf16.mxu0 0
        %276 = vmatpush1.bf16.msra.mxu0 0
        %277 = vmatprep.subr.bf16.mxu0 0
        %278 = vmatpush1.bf16.msra.mxu0 0
        %279 = vmatprep.subr.bf16.mxu0 0
        %280 = vmatpush1.bf16.msra.mxu0 0
        %281 = vmatprep.subr.bf16.mxu0 0
        %282 = vmatpush1.bf16.msra.mxu0 0
        %283 = vmatprep.subr.bf16.mxu0 0
        %284 = vmatpush1.bf16.msra.mxu0 0
        %285 = vmatprep.subr.bf16.mxu0 0
        %286 = vmatpush1.bf16.msra.mxu0 0
        %287 = vmatprep.subr.bf16.mxu0 0
        %288 = vmatpush1.bf16.msra.mxu0 0
        %289 = vmatprep.subr.bf16.mxu0 0
        %290 = vmatpush1.bf16.msra.mxu0 0
        %291 = vmatprep.subr.bf16.mxu0 0
        %292 = vmatpush1.bf16.msra.mxu0 0
        %293 = vmatprep.mubr.bf16.mxu0 0
        %294 = vmatmul.mubr.bf16.gmra.mrb[0].mxu0 %v218
        %v295 = vpop.f32.mrb[0].mxu0
        %v296 = vadd.f32 0.0, %v295
        %v297 = vpop.f32.mrb[0].mxu0
        %v298 = vpop.f32.mrb[0].mxu0
        %v299 = vpop.f32.mrb[0].mxu0
        %300 = vdwg.mxu0
        %v301 = vpack.c.bf16 %v255, %v255
        %v302 = vpack.c.bf16 %v257, %v257
        %303 = vst [vmem:[#allocation2] sm:$0xf] %v302
        %vm304 = vcmask 1045508
        %vm305 = vsmask.f32 5376
        %vm306 = vmand %vm304, %vm305
        %v307 = vld [vmem:[#allocation2] sm:$0x30]
        %v308 = vsel %vm306, 0, %v307
        %309 = vst [vmem:[#allocation2] sm:$0x30] %v308
        %v310 = vld [vmem:[#allocation2] sm:$0xff]
        %v311 = vld [vmem:[#allocation2 + $0x8] sm:$0xff]
        %v312 = vld [vmem:[#allocation2 + $0x10] sm:$0xff]
        %v313 = vld [vmem:[#allocation2 + $0x18] sm:$0xff]
        %v314 = vld [vmem:[#allocation2 + $0x20] sm:$0xff]
        %v315 = vld [vmem:[#allocation2 + $0x28] sm:$0xff]
        %v316 = vld [vmem:[#allocation2 + $0x30] sm:$0xff]
        %v317 = vld [vmem:[#allocation2 + $0x38] sm:$0xff]
        %318 = vmatprep.subr.bf16.mxu0 0
        %319 = vmatpush1.bf16.xpose.msra.mxu0 %v310
        %320 = vmatprep.subr.bf16.mxu0 0
        %321 = vmatpush1.bf16.xpose.msra.mxu0 %v311
        %322 = vmatprep.subr.bf16.mxu0 0
        %323 = vmatpush1.bf16.xpose.msra.mxu0 %v312
        %324 = vmatprep.subr.bf16.mxu0 0
        %325 = vmatpush1.bf16.xpose.msra.mxu0 %v313
        %326 = vmatprep.subr.bf16.mxu0 0
        %327 = vmatpush1.bf16.xpose.msra.mxu0 %v314
        %328 = vmatprep.subr.bf16.mxu0 0
        %329 = vmatpush1.bf16.xpose.msra.mxu0 %v315
        %330 = vmatprep.subr.bf16.mxu0 0
        %331 = vmatpush1.bf16.xpose.msra.mxu0 %v316
        %332 = vmatprep.subr.bf16.mxu0 0
        %333 = vmatpush1.bf16.xpose.msra.mxu0 %v317
        %334 = vmatprep.subr.bf16.mxu0 0
        %335 = vmatpush1.bf16.xpose.msra.mxu0 0
        %336 = vmatprep.subr.bf16.mxu0 0
        %337 = vmatpush1.bf16.xpose.msra.mxu0 0
        %338 = vmatprep.subr.bf16.mxu0 0
        %339 = vmatpush1.bf16.xpose.msra.mxu0 0
        %340 = vmatprep.subr.bf16.mxu0 0
        %341 = vmatpush1.bf16.xpose.msra.mxu0 0
        %342 = vmatprep.subr.bf16.mxu0 0
        %343 = vmatpush1.bf16.xpose.msra.mxu0 0
        %344 = vmatprep.subr.bf16.mxu0 0
        %345 = vmatpush1.bf16.xpose.msra.mxu0 0
        %346 = vmatprep.subr.bf16.mxu0 0
        %347 = vmatpush1.bf16.xpose.msra.mxu0 0
        %348 = vmatprep.subr.bf16.mxu0 0
        %349 = vmatpush1.bf16.xpose.msra.mxu0 0
        %350 = vmatprep.mubr.bf16.mxu0 0
        %351 = vmatmul.mubr.bf16.gmra.mrb[0].mxu0 %v301
        %v352 = vpop.f32.mrb[0].mxu0
        %v353 = vadd.f32 %v296, %v352
        %v354 = vpop.f32.mrb[0].mxu0
        %v355 = vpop.f32.mrb[0].mxu0
        %v356 = vpop.f32.mrb[0].mxu0
        %357 = vdwg.mxu0
        %358 = vst [vmem:[%s173] sm:$0xff] %v353
        %s359 = sand.u32 %s75, 1
        %s360 = scalar_lea.sflag [#allocation5], %s359
        %s361 = sand.u32 %s75, 1
        %s362 = smul.addr %s361, 8
        %s363 = scalar_lea.vmem [#allocation8], %s362
        // Predicated region
        $region37: #{tpu_custom_call.1} parent=27 // pred_check
          %p364 = pneg %p85
        $region38: #{tpu_custom_call.1} parent=27 // pred_check_branch
          %366 = sbr.rel (%p364) target = $region40
        $region39: #{tpu_custom_call.1} parent=27 // pred_region
          %s368 = ssub.s32 128, 128
          %369 = vsyncadd %s360, %s368
          %s370 = smul.addr %s20, 128
          %s371 = scalar_lea.hbm %s2, %s370
          %s373 = sshll.u32 %s363, 4
          %s374 = int_to_ptr.vmem [resolvable:$true] %s373
          %376 = dma.vmem_to_hbm [thread:$0]  %s374, 128, %s371, %s360
        $region40: #{tpu_custom_call.1} parent=27 // pred_fallthru
          _
      $region28: #{tpu_custom_call.1} parent=5 // pred_fallthru
        _
      %p377 = scmp.le.s32.totalorder 2, %s15
      // Predicated region
      $region41: #{tpu_custom_call.1} parent=5 // pred_check
        %p378 = pneg %p377
      $region42: #{tpu_custom_call.1} parent=5 // pred_check_branch
        %380 = sbr.rel (%p378) target = $region44
      $region43: #{tpu_custom_call.1} parent=5 // pred_region
        %s381 = ssub.s32 %s15, 2
        // Predicated region
        $region45: #{tpu_custom_call.1} parent=43 // pred_check
          %p382 = pneg %p91
        $region46: #{tpu_custom_call.1} parent=43 // pred_check_branch
          %384 = sbr.rel (%p382) target = $region48
        $region47: #{tpu_custom_call.1} parent=43 // pred_region
          %s385 = sand.u32 %s76, 1
          %s386 = scalar_lea.sflag [#allocation5], %s385
          %s387 = sand.u32 %s76, 1
          %s388 = smul.addr %s387, 8
          %s389 = scalar_lea.vmem [#allocation8], %s388
          %390 = dma.done %s386, 128
        $region48: #{tpu_custom_call.1} parent=43 // pred_fallthru
          _
      $region44: #{tpu_custom_call.1} parent=5 // pred_fallthru
        _
    $region6: #{tpu_custom_call.1} parent=1 // loop_footer
      %s19 = sadd.s32 1, %s15
    $region7: #{tpu_custom_call.1} parent=1 // loop_footer_branch
      %14 = sbr.rel target = $region3
    $region8: #{tpu_custom_call.1} parent=1 // loop_exit
      _
    %391 = vsyncpa [#allocation4], 1
    %s392 = scalar_lea.sflag [#allocation4], 1
    %393 = vsyncpa %s392, 1
    %394 = vsyncpa [#allocation7], 1
    %395 = vsyncpa [#allocation5], 1
    %s396 = scalar_lea.sflag [#allocation5], 1
    %397 = vsyncpa %s396, 1

</llo_original>
